<compile_context>
chip_gen: v7x
topology: tpu7x:2x2x1
jax: 0.10.0
libtpu: 0.0.40
codegen_flags: <defaults>
</compile_context>

<pallas_src>
import numpy as np
import jax
import jax.numpy as jnp
from jax.experimental import pallas as pl
from jax.experimental.pallas import tpu as pltpu

# ----- KANLinear hyper-parameters (efficient-KAN defaults) -------------------
GRID_SIZE = 5
SPLINE_ORDER = 3
N_COEF = GRID_SIZE + SPLINE_ORDER            # 8 spline basis functions / feature
N_KNOTS = GRID_SIZE + 2 * SPLINE_ORDER + 1   # 12 knots / feature
GRID_RANGE = (-1.0, 1.0)
NUMS = (6, 3, 1)                             # KAN_THI(nums=[6, 3, 1])

PAD_F = 8                                    # feature padding (one sublane tile)
K_FUSED = PAD_F * (1 + N_COEF)               # 72 columns in the fused weight

CHUNK_B = 256                                # lanes per unrolled inner step (2 vregs/value)
MAX_TILE_B = 4096                            # max batch block (amortizes grid overhead)

# Static uniform knot positions (what KANLinear registers in __init__), baked in as
# compile-time scalars.
_H = (GRID_RANGE[1] - GRID_RANGE[0]) / GRID_SIZE
_KNOTS_F32 = (np.arange(-SPLINE_ORDER, GRID_SIZE + SPLINE_ORDER + 1, dtype=np.float32)
              * np.float32(_H) + np.float32(GRID_RANGE[0]))
KNOTS = tuple(float(v) for v in _KNOTS_F32)  # len == N_KNOTS

# Product of the de Boor denominators for uniform knots: (1h)(2h)(3h) = 6*h^3.
# The in-kernel recursion skips these divides; 1/(6*h^3) is folded into the spline
# columns of the fused weights in params_for_kernel (kernel and packer must stay in sync).
_DE_BOOR_SCALE = 1.0
for _k in range(1, SPLINE_ORDER + 1):
    _DE_BOOR_SCALE *= _k * _H


# ----------------------------- Pallas kernel --------------------------------
def _kan_layer(x, w):
    """One KANLinear layer fused into a single MXU contraction.

    x: (PAD_F, C)  activations, batch on lanes (rows >= in_features are zero)
    w: (PAD_F, K_FUSED) fused [base | scaled spline] weight (zero padded, includes
       the 1/(6*h^3) de Boor normalization on the spline columns)
    returns (PAD_F, C); rows >= out_features are exactly zero.
    """
    # d_j = x - t_j, computed once and shared across all three recursion levels.
    d = [x - kn for kn in KNOTS]                                      # 12 planes
    # Order-0 bases as step-function differences: B_{j,0} = [x>=t_j] - [x>=t_{j+1}].
    s = [jnp.where(x >= kn, 1.0, 0.0) for kn in KNOTS]
    bases = [s[j] - s[j + 1] for j in range(N_KNOTS - 1)]             # 11 bases
    # Unnormalized de Boor / Cox recursion (uniform knots): divides deferred to the
    # weights, (t_{j+k+1}-x) = -d_{j+k+1}  ->  2 muls + 1 sub per basis update.
    for k in range(1, SPLINE_ORDER + 1):
        bases = [d[j] * bases[j] - d[j + k + 1] * bases[j + 1]
                 for j in range(len(bases) - 1)]                      # -> N_COEF bases
    silu = x * jax.nn.sigmoid(x)
    act = jnp.concatenate([silu] + bases, axis=0)                     # (K_FUSED, C)
    return jnp.dot(w, act, preferred_element_type=jnp.float32)        # MXU (8, C)


def _make_kernel(tile_b, chunk_b):
    n_chunks = tile_b // chunk_b

    def kan_thi_kernel(x_ref, w1_ref, w2_ref, o_ref):
        w1 = w1_ref[...]                                              # VMEM resident (8,72)
        w2 = w2_ref[...]
        # Statically-unrolled chunk loop with constant slice offsets: bounds live
        # values to (8, chunk_b) = 2 vregs each, and every o_ref write is a
        # full-lane unmasked store.
        for c in range(n_chunks):
            sl = slice(c * chunk_b, (c + 1) * chunk_b)
            x = x_ref[:, sl]                                          # (PAD_F, chunk_b)
            x = jnp.nan_to_num(x, nan=0.0)                            # == nan_to_num(x)*~isnan(x)
            h = _kan_layer(x, w1)                                     # KANLinear(6 -> 3)
            h = _kan_layer(h, w2)                                     # KANLinear(3 -> 1)
            o_ref[:, sl] = jax.nn.sigmoid(h[0:1, :])                  # (1, chunk_b) store

    return kan_thi_kernel


def _pick_tile_b(b):
    """Batch block size: >=2 grid tiles whenever the batch allows (feeds both
    TensorCores on v7x), capped at MAX_TILE_B, always a multiple of CHUNK_B."""
    b_chunks = max(1, -(-b // CHUNK_B))
    tile_chunks = min(MAX_TILE_B // CHUNK_B, max(1, -(-b_chunks // 2)))
    return tile_chunks * CHUNK_B


@jax.jit
def kan_thi_forward(x, kernel_params):
    """x: (B, 6) float32 (may contain NaN) -> (B, 1) float32."""
    w1, w2 = kernel_params
    b, in_f = x.shape
    tile_b = _pick_tile_b(b)
    n_tiles = pl.cdiv(b, tile_b)
    b_pad = n_tiles * tile_b
    # Layout plumbing: batch on lanes, features on sublanes padded to 8.
    # (Review item 6: could move in-kernel onto the idle XLU; kept host-side for
    #  lowering robustness — few-percent item.)
    xt = jnp.zeros((PAD_F, b_pad), jnp.float32).at[:in_f, :b].set(x.T)
    out = pl.pallas_call(
        _make_kernel(tile_b, CHUNK_B),
        out_shape=jax.ShapeDtypeStruct((1, b_pad), jnp.float32),
        grid_spec=pltpu.PrefetchScalarGridSpec(
            num_scalar_prefetch=0,
            grid=(n_tiles,),
            in_specs=[
                pl.BlockSpec((PAD_F, tile_b), lambda i: (0, i)),
                pl.BlockSpec((PAD_F, K_FUSED), lambda i: (0, 0)),   # VMEM-resident weight
                pl.BlockSpec((PAD_F, K_FUSED), lambda i: (0, 0)),   # VMEM-resident weight
            ],
            out_specs=pl.BlockSpec((1, tile_b), lambda i: (0, i)),
        ),
        compiler_params=pltpu.CompilerParams(
            dimension_semantics=("parallel",)),                     # shard batch tiles across TCs
    )(xt, w1, w2)
    return out[0, :b][:, None]


# -------------------------- parameter construction --------------------------
def make_params(key, nums=NUMS):
    knots = jnp.asarray(_KNOTS_F32)
    layers = []
    for li in range(len(nums) - 1):
        in_f, out_f = nums[li], nums[li + 1]
        key, k1, k2, k3 = jax.random.split(key, 4)
        base_w = jax.random.uniform(k1, (out_f, in_f), jnp.float32, -0.5, 0.5)
        spline_w = jax.random.uniform(k2, (out_f, in_f, N_COEF), jnp.float32, -0.3, 0.3)
        spline_scaler = jax.random.uniform(k3, (out_f, in_f), jnp.float32, 0.5, 1.5)
        grid = jnp.broadcast_to(knots, (in_f, N_KNOTS)).astype(jnp.float32)
        layers.append(dict(grid=grid, base_w=base_w, spline_w=spline_w, scaler=spline_scaler))
    return layers


def params_for_kernel(layers):
    """Fuse base weight + scaled spline weight into one zero-padded (8, 72) matrix/layer.

    Column layout matches act = concat([silu, bases_0, ..., bases_{N_COEF-1}]):
      w[o, i]               = base_w[o, i]                                   (i < in_f)
      w[o, PAD_F*(1+c) + i] = spline_w[o, i, c] * scaler[o, i] / (6*h^3)     (i < in_f)
    The 1/(6*h^3) factor compensates for the divide-free de Boor recursion in-kernel.
    All padding rows/cols are zero so padded features/outputs contribute exactly zero.
    """
    ws = []
    inv_scale = np.float32(1.0 / _DE_BOOR_SCALE)
    for p in layers:
        base_w, spline_w, scaler = p["base_w"], p["spline_w"], p["scaler"]
        out_f, in_f = base_w.shape
        scaled = spline_w * scaler[..., None] * inv_scale           # (OUT, IN, COEF)
        w = jnp.zeros((PAD_F, K_FUSED), jnp.float32)
        w = w.at[:out_f, :in_f].set(base_w)
        sw = jnp.zeros((PAD_F, N_COEF, PAD_F), jnp.float32)         # (OUT_pad, COEF, IN_pad)
        sw = sw.at[:out_f, :, :in_f].set(jnp.transpose(scaled, (0, 2, 1)))
        w = w.at[:, PAD_F:].set(sw.reshape(PAD_F, N_COEF * PAD_F))
        ws.append(w)
    return tuple(ws)


# ------------------------------ pure-JAX reference --------------------------
def _ref_b_splines(x, grid):
    xg = x[..., None]                                               # (B, IN, 1)
    bases = ((xg >= grid[:, :-1]) & (xg < grid[:, 1:])).astype(x.dtype)
    for k in range(1, SPLINE_ORDER + 1):
        bases = ((xg - grid[:, :-(k + 1)]) / (grid[:, k:-1] - grid[:, :-(k + 1)]) * bases[..., :-1]
                 + (grid[:, k + 1:] - xg) / (grid[:, k + 1:] - grid[:, 1:-k]) * bases[..., 1:])
    return bases                                                    # (B, IN, N_COEF)


def ref_forward(x, layers):
    mask = jnp.logical_not(jnp.isnan(x))
    x = jnp.nan_to_num(x, nan=0.0) * mask
    for p in layers:
        out_f = p["base_w"].shape[0]
        base = jax.nn.silu(x) @ p["base_w"].T
        scaled = p["spline_w"] * p["scaler"][..., None]
        spl = _ref_b_splines(x, p["grid"]).reshape(x.shape[0], -1) @ scaled.reshape(out_f, -1).T
        x = base + spl
    return jax.nn.sigmoid(x)


# ----------------------------------- main ------------------------------------
if __name__ == "__main__":
    key = jax.random.PRNGKey(0)
    key, kx, kp = jax.random.split(key, 3)

    B = 16
    x = jax.random.normal(kx, (B, NUMS[0]), jnp.float32) * 0.6
    # introduce NaNs so the masking path is exercised
    x = x.at[0, 0].set(jnp.nan)
    x = x.at[3, 2].set(jnp.nan)
    x = x.at[7, 5].set(jnp.nan)

    layers = make_params(kp)
    kernel_params = params_for_kernel(layers)

    out = jax.block_until_ready(kan_thi_forward(x, kernel_params))
    ref = jax.block_until_ready(ref_forward(x, layers))

    assert out.shape == (B, NUMS[-1])
    assert jnp.allclose(out, ref, atol=1e-5, rtol=1e-5), (out, ref)

    print("KERNEL_OK")
</pallas_src>

<mosaic_0001>
module attributes {stable_mosaic.version = 11 : i64} {
  func.func @kan_thi_kernel(%arg0: i32, %arg1: memref<8x256xf32, #tpu.memory_space<vmem>>, %arg2: memref<8x72xf32, #tpu.memory_space<vmem>>, %arg3: memref<8x72xf32, #tpu.memory_space<vmem>>, %arg4: memref<1x256xf32, #tpu.memory_space<vmem>>) attributes {dimension_semantics = [#tpu.dimension_semantics<parallel>], iteration_bounds = array<i64: 1>, scalar_prefetch = 0 : i64, scratch_operands = 0 : i64, tpu.core_type = #tpu.core_type<tc>, window_params = [{transform_indices = @transform_0, window_bounds = array<i64: 8, 256>}, {pipeline_mode = #tpu.pipeline_mode<synchronous>, transform_indices = @transform_1, window_bounds = array<i64: 8, 72>}, {pipeline_mode = #tpu.pipeline_mode<synchronous>, transform_indices = @transform_2, window_bounds = array<i64: 8, 72>}, {transform_indices = @transform_3, window_bounds = array<i64: 1, 256>}]} {
    %c0 = arith.constant 0 : index
    %c0_0 = arith.constant 0 : index
    %0 = vector.load %arg2[%c0, %c0_0] : memref<8x72xf32, #tpu.memory_space<vmem>>, vector<8x72xf32>
    %c0_1 = arith.constant 0 : index
    %c0_2 = arith.constant 0 : index
    %1 = vector.load %arg3[%c0_1, %c0_2] : memref<8x72xf32, #tpu.memory_space<vmem>>, vector<8x72xf32>
    %c0_3 = arith.constant 0 : index
    %c0_4 = arith.constant 0 : index
    %2 = vector.load %arg1[%c0_3, %c0_4] : memref<8x256xf32, #tpu.memory_space<vmem>>, vector<8x256xf32>
    %cst = arith.constant 0.000000e+00 : f32
    %3 = arith.cmpf one, %2, %2 : vector<8x256xf32>
    %4 = vector.broadcast %cst : f32 to vector<8x256xf32>
    %5 = arith.select %3, %4, %2 : vector<8x256xi1>, vector<8x256xf32>
    %cst_5 = arith.constant 0x7F800000 : f32
    %6 = vector.broadcast %cst_5 : f32 to vector<8x256xf32>
    %7 = arith.cmpf oeq, %5, %6 : vector<8x256xf32>
    %cst_6 = arith.constant 3.40282347E+38 : f32
    %8 = vector.broadcast %cst_6 : f32 to vector<8x256xf32>
    %9 = arith.select %7, %8, %5 : vector<8x256xi1>, vector<8x256xf32>
    %cst_7 = arith.constant 0xFF800000 : f32
    %10 = vector.broadcast %cst_7 : f32 to vector<8x256xf32>
    %11 = arith.cmpf oeq, %9, %10 : vector<8x256xf32>
    %cst_8 = arith.constant -3.40282347E+38 : f32
    %12 = vector.broadcast %cst_8 : f32 to vector<8x256xf32>
    %13 = arith.select %11, %12, %9 : vector<8x256xi1>, vector<8x256xf32>
    %cst_9 = arith.constant -2.200000e+00 : f32
    %14 = vector.broadcast %cst_9 : f32 to vector<8x256xf32>
    %15 = arith.subf %13, %14 : vector<8x256xf32>
    %cst_10 = arith.constant -1.800000e+00 : f32
    %16 = vector.broadcast %cst_10 : f32 to vector<8x256xf32>
    %17 = arith.subf %13, %16 : vector<8x256xf32>
    %cst_11 = arith.constant -1.400000e+00 : f32
    %18 = vector.broadcast %cst_11 : f32 to vector<8x256xf32>
    %19 = arith.subf %13, %18 : vector<8x256xf32>
    %cst_12 = arith.constant -1.000000e+00 : f32
    %20 = vector.broadcast %cst_12 : f32 to vector<8x256xf32>
    %21 = arith.subf %13, %20 : vector<8x256xf32>
    %cst_13 = arith.constant -6.000000e-01 : f32
    %22 = vector.broadcast %cst_13 : f32 to vector<8x256xf32>
    %23 = arith.subf %13, %22 : vector<8x256xf32>
    %cst_14 = arith.constant -0.199999988 : f32
    %24 = vector.broadcast %cst_14 : f32 to vector<8x256xf32>
    %25 = arith.subf %13, %24 : vector<8x256xf32>
    %cst_15 = arith.constant 0.200000048 : f32
    %26 = vector.broadcast %cst_15 : f32 to vector<8x256xf32>
    %27 = arith.subf %13, %26 : vector<8x256xf32>
    %cst_16 = arith.constant 6.000000e-01 : f32
    %28 = vector.broadcast %cst_16 : f32 to vector<8x256xf32>
    %29 = arith.subf %13, %28 : vector<8x256xf32>
    %cst_17 = arith.constant 1.000000e+00 : f32
    %30 = vector.broadcast %cst_17 : f32 to vector<8x256xf32>
    %31 = arith.subf %13, %30 : vector<8x256xf32>
    %cst_18 = arith.constant 1.4000001 : f32
    %32 = vector.broadcast %cst_18 : f32 to vector<8x256xf32>
    %33 = arith.subf %13, %32 : vector<8x256xf32>
    %cst_19 = arith.constant 1.800000e+00 : f32
    %34 = vector.broadcast %cst_19 : f32 to vector<8x256xf32>
    %35 = arith.subf %13, %34 : vector<8x256xf32>
    %cst_20 = arith.constant 2.200000e+00 : f32
    %36 = vector.broadcast %cst_20 : f32 to vector<8x256xf32>
    %37 = arith.subf %13, %36 : vector<8x256xf32>
    %cst_21 = arith.constant -2.200000e+00 : f32
    %38 = vector.broadcast %cst_21 : f32 to vector<8x256xf32>
    %39 = arith.cmpf oge, %13, %38 : vector<8x256xf32>
    %cst_22 = arith.constant 1.000000e+00 : f32
    %cst_23 = arith.constant 0.000000e+00 : f32
    %40 = vector.broadcast %cst_22 : f32 to vector<8x256xf32>
    %41 = vector.broadcast %cst_23 : f32 to vector<8x256xf32>
    %42 = arith.select %39, %40, %41 : vector<8x256xi1>, vector<8x256xf32>
    %cst_24 = arith.constant -1.800000e+00 : f32
    %43 = vector.broadcast %cst_24 : f32 to vector<8x256xf32>
    %44 = arith.cmpf oge, %13, %43 : vector<8x256xf32>
    %cst_25 = arith.constant 1.000000e+00 : f32
    %cst_26 = arith.constant 0.000000e+00 : f32
    %45 = vector.broadcast %cst_25 : f32 to vector<8x256xf32>
    %46 = vector.broadcast %cst_26 : f32 to vector<8x256xf32>
    %47 = arith.select %44, %45, %46 : vector<8x256xi1>, vector<8x256xf32>
    %cst_27 = arith.constant -1.400000e+00 : f32
    %48 = vector.broadcast %cst_27 : f32 to vector<8x256xf32>
    %49 = arith.cmpf oge, %13, %48 : vector<8x256xf32>
    %cst_28 = arith.constant 1.000000e+00 : f32
    %cst_29 = arith.constant 0.000000e+00 : f32
    %50 = vector.broadcast %cst_28 : f32 to vector<8x256xf32>
    %51 = vector.broadcast %cst_29 : f32 to vector<8x256xf32>
    %52 = arith.select %49, %50, %51 : vector<8x256xi1>, vector<8x256xf32>
    %cst_30 = arith.constant -1.000000e+00 : f32
    %53 = vector.broadcast %cst_30 : f32 to vector<8x256xf32>
    %54 = arith.cmpf oge, %13, %53 : vector<8x256xf32>
    %cst_31 = arith.constant 1.000000e+00 : f32
    %cst_32 = arith.constant 0.000000e+00 : f32
    %55 = vector.broadcast %cst_31 : f32 to vector<8x256xf32>
    %56 = vector.broadcast %cst_32 : f32 to vector<8x256xf32>
    %57 = arith.select %54, %55, %56 : vector<8x256xi1>, vector<8x256xf32>
    %cst_33 = arith.constant -6.000000e-01 : f32
    %58 = vector.broadcast %cst_33 : f32 to vector<8x256xf32>
    %59 = arith.cmpf oge, %13, %58 : vector<8x256xf32>
    %cst_34 = arith.constant 1.000000e+00 : f32
    %cst_35 = arith.constant 0.000000e+00 : f32
    %60 = vector.broadcast %cst_34 : f32 to vector<8x256xf32>
    %61 = vector.broadcast %cst_35 : f32 to vector<8x256xf32>
    %62 = arith.select %59, %60, %61 : vector<8x256xi1>, vector<8x256xf32>
    %cst_36 = arith.constant -0.199999988 : f32
    %63 = vector.broadcast %cst_36 : f32 to vector<8x256xf32>
    %64 = arith.cmpf oge, %13, %63 : vector<8x256xf32>
    %cst_37 = arith.constant 1.000000e+00 : f32
    %cst_38 = arith.constant 0.000000e+00 : f32
    %65 = vector.broadcast %cst_37 : f32 to vector<8x256xf32>
    %66 = vector.broadcast %cst_38 : f32 to vector<8x256xf32>
    %67 = arith.select %64, %65, %66 : vector<8x256xi1>, vector<8x256xf32>
    %cst_39 = arith.constant 0.200000048 : f32
    %68 = vector.broadcast %cst_39 : f32 to vector<8x256xf32>
    %69 = arith.cmpf oge, %13, %68 : vector<8x256xf32>
    %cst_40 = arith.constant 1.000000e+00 : f32
    %cst_41 = arith.constant 0.000000e+00 : f32
    %70 = vector.broadcast %cst_40 : f32 to vector<8x256xf32>
    %71 = vector.broadcast %cst_41 : f32 to vector<8x256xf32>
    %72 = arith.select %69, %70, %71 : vector<8x256xi1>, vector<8x256xf32>
    %cst_42 = arith.constant 6.000000e-01 : f32
    %73 = vector.broadcast %cst_42 : f32 to vector<8x256xf32>
    %74 = arith.cmpf oge, %13, %73 : vector<8x256xf32>
    %cst_43 = arith.constant 1.000000e+00 : f32
    %cst_44 = arith.constant 0.000000e+00 : f32
    %75 = vector.broadcast %cst_43 : f32 to vector<8x256xf32>
    %76 = vector.broadcast %cst_44 : f32 to vector<8x256xf32>
    %77 = arith.select %74, %75, %76 : vector<8x256xi1>, vector<8x256xf32>
    %cst_45 = arith.constant 1.000000e+00 : f32
    %78 = vector.broadcast %cst_45 : f32 to vector<8x256xf32>
    %79 = arith.cmpf oge, %13, %78 : vector<8x256xf32>
    %cst_46 = arith.constant 1.000000e+00 : f32
    %cst_47 = arith.constant 0.000000e+00 : f32
    %80 = vector.broadcast %cst_46 : f32 to vector<8x256xf32>
    %81 = vector.broadcast %cst_47 : f32 to vector<8x256xf32>
    %82 = arith.select %79, %80, %81 : vector<8x256xi1>, vector<8x256xf32>
    %cst_48 = arith.constant 1.4000001 : f32
    %83 = vector.broadcast %cst_48 : f32 to vector<8x256xf32>
    %84 = arith.cmpf oge, %13, %83 : vector<8x256xf32>
    %cst_49 = arith.constant 1.000000e+00 : f32
    %cst_50 = arith.constant 0.000000e+00 : f32
    %85 = vector.broadcast %cst_49 : f32 to vector<8x256xf32>
    %86 = vector.broadcast %cst_50 : f32 to vector<8x256xf32>
    %87 = arith.select %84, %85, %86 : vector<8x256xi1>, vector<8x256xf32>
    %cst_51 = arith.constant 1.800000e+00 : f32
    %88 = vector.broadcast %cst_51 : f32 to vector<8x256xf32>
    %89 = arith.cmpf oge, %13, %88 : vector<8x256xf32>
    %cst_52 = arith.constant 1.000000e+00 : f32
    %cst_53 = arith.constant 0.000000e+00 : f32
    %90 = vector.broadcast %cst_52 : f32 to vector<8x256xf32>
    %91 = vector.broadcast %cst_53 : f32 to vector<8x256xf32>
    %92 = arith.select %89, %90, %91 : vector<8x256xi1>, vector<8x256xf32>
    %cst_54 = arith.constant 2.200000e+00 : f32
    %93 = vector.broadcast %cst_54 : f32 to vector<8x256xf32>
    %94 = arith.cmpf oge, %13, %93 : vector<8x256xf32>
    %cst_55 = arith.constant 1.000000e+00 : f32
    %cst_56 = arith.constant 0.000000e+00 : f32
    %95 = vector.broadcast %cst_55 : f32 to vector<8x256xf32>
    %96 = vector.broadcast %cst_56 : f32 to vector<8x256xf32>
    %97 = arith.select %94, %95, %96 : vector<8x256xi1>, vector<8x256xf32>
    %98 = arith.subf %42, %47 : vector<8x256xf32>
    %99 = arith.subf %47, %52 : vector<8x256xf32>
    %100 = arith.subf %52, %57 : vector<8x256xf32>
    %101 = arith.subf %57, %62 : vector<8x256xf32>
    %102 = arith.subf %62, %67 : vector<8x256xf32>
    %103 = arith.subf %67, %72 : vector<8x256xf32>
    %104 = arith.subf %72, %77 : vector<8x256xf32>
    %105 = arith.subf %77, %82 : vector<8x256xf32>
    %106 = arith.subf %82, %87 : vector<8x256xf32>
    %107 = arith.subf %87, %92 : vector<8x256xf32>
    %108 = arith.subf %92, %97 : vector<8x256xf32>
    %109 = arith.mulf %15, %98 : vector<8x256xf32>
    %110 = arith.mulf %19, %99 : vector<8x256xf32>
    %111 = arith.subf %109, %110 : vector<8x256xf32>
    %112 = arith.mulf %17, %99 : vector<8x256xf32>
    %113 = arith.mulf %21, %100 : vector<8x256xf32>
    %114 = arith.subf %112, %113 : vector<8x256xf32>
    %115 = arith.mulf %19, %100 : vector<8x256xf32>
    %116 = arith.mulf %23, %101 : vector<8x256xf32>
    %117 = arith.subf %115, %116 : vector<8x256xf32>
    %118 = arith.mulf %21, %101 : vector<8x256xf32>
    %119 = arith.mulf %25, %102 : vector<8x256xf32>
    %120 = arith.subf %118, %119 : vector<8x256xf32>
    %121 = arith.mulf %23, %102 : vector<8x256xf32>
    %122 = arith.mulf %27, %103 : vector<8x256xf32>
    %123 = arith.subf %121, %122 : vector<8x256xf32>
    %124 = arith.mulf %25, %103 : vector<8x256xf32>
    %125 = arith.mulf %29, %104 : vector<8x256xf32>
    %126 = arith.subf %124, %125 : vector<8x256xf32>
    %127 = arith.mulf %27, %104 : vector<8x256xf32>
    %128 = arith.mulf %31, %105 : vector<8x256xf32>
    %129 = arith.subf %127, %128 : vector<8x256xf32>
    %130 = arith.mulf %29, %105 : vector<8x256xf32>
    %131 = arith.mulf %33, %106 : vector<8x256xf32>
    %132 = arith.subf %130, %131 : vector<8x256xf32>
    %133 = arith.mulf %31, %106 : vector<8x256xf32>
    %134 = arith.mulf %35, %107 : vector<8x256xf32>
    %135 = arith.subf %133, %134 : vector<8x256xf32>
    %136 = arith.mulf %33, %107 : vector<8x256xf32>
    %137 = arith.mulf %37, %108 : vector<8x256xf32>
    %138 = arith.subf %136, %137 : vector<8x256xf32>
    %139 = arith.mulf %15, %111 : vector<8x256xf32>
    %140 = arith.mulf %21, %114 : vector<8x256xf32>
    %141 = arith.subf %139, %140 : vector<8x256xf32>
    %142 = arith.mulf %17, %114 : vector<8x256xf32>
    %143 = arith.mulf %23, %117 : vector<8x256xf32>
    %144 = arith.subf %142, %143 : vector<8x256xf32>
    %145 = arith.mulf %19, %117 : vector<8x256xf32>
    %146 = arith.mulf %25, %120 : vector<8x256xf32>
    %147 = arith.subf %145, %146 : vector<8x256xf32>
    %148 = arith.mulf %21, %120 : vector<8x256xf32>
    %149 = arith.mulf %27, %123 : vector<8x256xf32>
    %150 = arith.subf %148, %149 : vector<8x256xf32>
    %151 = arith.mulf %23, %123 : vector<8x256xf32>
    %152 = arith.mulf %29, %126 : vector<8x256xf32>
    %153 = arith.subf %151, %152 : vector<8x256xf32>
    %154 = arith.mulf %25, %126 : vector<8x256xf32>
    %155 = arith.mulf %31, %129 : vector<8x256xf32>
    %156 = arith.subf %154, %155 : vector<8x256xf32>
    %157 = arith.mulf %27, %129 : vector<8x256xf32>
    %158 = arith.mulf %33, %132 : vector<8x256xf32>
    %159 = arith.subf %157, %158 : vector<8x256xf32>
    %160 = arith.mulf %29, %132 : vector<8x256xf32>
    %161 = arith.mulf %35, %135 : vector<8x256xf32>
    %162 = arith.subf %160, %161 : vector<8x256xf32>
    %163 = arith.mulf %31, %135 : vector<8x256xf32>
    %164 = arith.mulf %37, %138 : vector<8x256xf32>
    %165 = arith.subf %163, %164 : vector<8x256xf32>
    %166 = arith.mulf %15, %141 : vector<8x256xf32>
    %167 = arith.mulf %23, %144 : vector<8x256xf32>
    %168 = arith.subf %166, %167 : vector<8x256xf32>
    %169 = arith.mulf %17, %144 : vector<8x256xf32>
    %170 = arith.mulf %25, %147 : vector<8x256xf32>
    %171 = arith.subf %169, %170 : vector<8x256xf32>
    %172 = arith.mulf %19, %147 : vector<8x256xf32>
    %173 = arith.mulf %27, %150 : vector<8x256xf32>
    %174 = arith.subf %172, %173 : vector<8x256xf32>
    %175 = arith.mulf %21, %150 : vector<8x256xf32>
    %176 = arith.mulf %29, %153 : vector<8x256xf32>
    %177 = arith.subf %175, %176 : vector<8x256xf32>
    %178 = arith.mulf %23, %153 : vector<8x256xf32>
    %179 = arith.mulf %31, %156 : vector<8x256xf32>
    %180 = arith.subf %178, %179 : vector<8x256xf32>
    %181 = arith.mulf %25, %156 : vector<8x256xf32>
    %182 = arith.mulf %33, %159 : vector<8x256xf32>
    %183 = arith.subf %181, %182 : vector<8x256xf32>
    %184 = arith.mulf %27, %159 : vector<8x256xf32>
    %185 = arith.mulf %35, %162 : vector<8x256xf32>
    %186 = arith.subf %184, %185 : vector<8x256xf32>
    %187 = arith.mulf %29, %162 : vector<8x256xf32>
    %188 = arith.mulf %37, %165 : vector<8x256xf32>
    %189 = arith.subf %187, %188 : vector<8x256xf32>
    %190 = arith.negf %13 : vector<8x256xf32>
    %191 = math.exp %190 : vector<8x256xf32>
    %cst_57 = arith.constant 1.000000e+00 : f32
    %192 = vector.broadcast %cst_57 : f32 to vector<8x256xf32>
    %193 = arith.addf %192, %191 : vector<8x256xf32>
    %194 = arith.divf %192, %193 : vector<8x256xf32>
    %195 = arith.mulf %13, %194 : vector<8x256xf32>
    %196 = tpu.concatenate %195, %168, %171, %174, %177, %180, %183, %186, %189 in 0 : vector<8x256xf32>, vector<8x256xf32>, vector<8x256xf32>, vector<8x256xf32>, vector<8x256xf32>, vector<8x256xf32>, vector<8x256xf32>, vector<8x256xf32>, vector<8x256xf32> -> vector<72x256xf32>
    %cst_58 = arith.constant dense<0.000000e+00> : vector<8x256xf32>
    %197 = tpu.matmul %0, %196, %cst_58 {dimension_numbers = #tpu.dot_dimension_numbers<[1], [0], [0], [1], [0, 0, 1, 1], [], []>} : vector<8x72xf32>, vector<72x256xf32>, vector<8x256xf32> -> vector<8x256xf32>
    %cst_59 = arith.constant -2.200000e+00 : f32
    %198 = vector.broadcast %cst_59 : f32 to vector<8x256xf32>
    %199 = arith.subf %197, %198 : vector<8x256xf32>
    %cst_60 = arith.constant -1.800000e+00 : f32
    %200 = vector.broadcast %cst_60 : f32 to vector<8x256xf32>
    %201 = arith.subf %197, %200 : vector<8x256xf32>
    %cst_61 = arith.constant -1.400000e+00 : f32
    %202 = vector.broadcast %cst_61 : f32 to vector<8x256xf32>
    %203 = arith.subf %197, %202 : vector<8x256xf32>
    %cst_62 = arith.constant -1.000000e+00 : f32
    %204 = vector.broadcast %cst_62 : f32 to vector<8x256xf32>
    %205 = arith.subf %197, %204 : vector<8x256xf32>
    %cst_63 = arith.constant -6.000000e-01 : f32
    %206 = vector.broadcast %cst_63 : f32 to vector<8x256xf32>
    %207 = arith.subf %197, %206 : vector<8x256xf32>
    %cst_64 = arith.constant -0.199999988 : f32
    %208 = vector.broadcast %cst_64 : f32 to vector<8x256xf32>
    %209 = arith.subf %197, %208 : vector<8x256xf32>
    %cst_65 = arith.constant 0.200000048 : f32
    %210 = vector.broadcast %cst_65 : f32 to vector<8x256xf32>
    %211 = arith.subf %197, %210 : vector<8x256xf32>
    %cst_66 = arith.constant 6.000000e-01 : f32
    %212 = vector.broadcast %cst_66 : f32 to vector<8x256xf32>
    %213 = arith.subf %197, %212 : vector<8x256xf32>
    %cst_67 = arith.constant 1.000000e+00 : f32
    %214 = vector.broadcast %cst_67 : f32 to vector<8x256xf32>
    %215 = arith.subf %197, %214 : vector<8x256xf32>
    %cst_68 = arith.constant 1.4000001 : f32
    %216 = vector.broadcast %cst_68 : f32 to vector<8x256xf32>
    %217 = arith.subf %197, %216 : vector<8x256xf32>
    %cst_69 = arith.constant 1.800000e+00 : f32
    %218 = vector.broadcast %cst_69 : f32 to vector<8x256xf32>
    %219 = arith.subf %197, %218 : vector<8x256xf32>
    %cst_70 = arith.constant 2.200000e+00 : f32
    %220 = vector.broadcast %cst_70 : f32 to vector<8x256xf32>
    %221 = arith.subf %197, %220 : vector<8x256xf32>
    %cst_71 = arith.constant -2.200000e+00 : f32
    %222 = vector.broadcast %cst_71 : f32 to vector<8x256xf32>
    %223 = arith.cmpf oge, %197, %222 : vector<8x256xf32>
    %cst_72 = arith.constant 1.000000e+00 : f32
    %cst_73 = arith.constant 0.000000e+00 : f32
    %224 = vector.broadcast %cst_72 : f32 to vector<8x256xf32>
    %225 = vector.broadcast %cst_73 : f32 to vector<8x256xf32>
    %226 = arith.select %223, %224, %225 : vector<8x256xi1>, vector<8x256xf32>
    %cst_74 = arith.constant -1.800000e+00 : f32
    %227 = vector.broadcast %cst_74 : f32 to vector<8x256xf32>
    %228 = arith.cmpf oge, %197, %227 : vector<8x256xf32>
    %cst_75 = arith.constant 1.000000e+00 : f32
    %cst_76 = arith.constant 0.000000e+00 : f32
    %229 = vector.broadcast %cst_75 : f32 to vector<8x256xf32>
    %230 = vector.broadcast %cst_76 : f32 to vector<8x256xf32>
    %231 = arith.select %228, %229, %230 : vector<8x256xi1>, vector<8x256xf32>
    %cst_77 = arith.constant -1.400000e+00 : f32
    %232 = vector.broadcast %cst_77 : f32 to vector<8x256xf32>
    %233 = arith.cmpf oge, %197, %232 : vector<8x256xf32>
    %cst_78 = arith.constant 1.000000e+00 : f32
    %cst_79 = arith.constant 0.000000e+00 : f32
    %234 = vector.broadcast %cst_78 : f32 to vector<8x256xf32>
    %235 = vector.broadcast %cst_79 : f32 to vector<8x256xf32>
    %236 = arith.select %233, %234, %235 : vector<8x256xi1>, vector<8x256xf32>
    %cst_80 = arith.constant -1.000000e+00 : f32
    %237 = vector.broadcast %cst_80 : f32 to vector<8x256xf32>
    %238 = arith.cmpf oge, %197, %237 : vector<8x256xf32>
    %cst_81 = arith.constant 1.000000e+00 : f32
    %cst_82 = arith.constant 0.000000e+00 : f32
    %239 = vector.broadcast %cst_81 : f32 to vector<8x256xf32>
    %240 = vector.broadcast %cst_82 : f32 to vector<8x256xf32>
    %241 = arith.select %238, %239, %240 : vector<8x256xi1>, vector<8x256xf32>
    %cst_83 = arith.constant -6.000000e-01 : f32
    %242 = vector.broadcast %cst_83 : f32 to vector<8x256xf32>
    %243 = arith.cmpf oge, %197, %242 : vector<8x256xf32>
    %cst_84 = arith.constant 1.000000e+00 : f32
    %cst_85 = arith.constant 0.000000e+00 : f32
    %244 = vector.broadcast %cst_84 : f32 to vector<8x256xf32>
    %245 = vector.broadcast %cst_85 : f32 to vector<8x256xf32>
    %246 = arith.select %243, %244, %245 : vector<8x256xi1>, vector<8x256xf32>
    %cst_86 = arith.constant -0.199999988 : f32
    %247 = vector.broadcast %cst_86 : f32 to vector<8x256xf32>
    %248 = arith.cmpf oge, %197, %247 : vector<8x256xf32>
    %cst_87 = arith.constant 1.000000e+00 : f32
    %cst_88 = arith.constant 0.000000e+00 : f32
    %249 = vector.broadcast %cst_87 : f32 to vector<8x256xf32>
    %250 = vector.broadcast %cst_88 : f32 to vector<8x256xf32>
    %251 = arith.select %248, %249, %250 : vector<8x256xi1>, vector<8x256xf32>
    %cst_89 = arith.constant 0.200000048 : f32
    %252 = vector.broadcast %cst_89 : f32 to vector<8x256xf32>
    %253 = arith.cmpf oge, %197, %252 : vector<8x256xf32>
    %cst_90 = arith.constant 1.000000e+00 : f32
    %cst_91 = arith.constant 0.000000e+00 : f32
    %254 = vector.broadcast %cst_90 : f32 to vector<8x256xf32>
    %255 = vector.broadcast %cst_91 : f32 to vector<8x256xf32>
    %256 = arith.select %253, %254, %255 : vector<8x256xi1>, vector<8x256xf32>
    %cst_92 = arith.constant 6.000000e-01 : f32
    %257 = vector.broadcast %cst_92 : f32 to vector<8x256xf32>
    %258 = arith.cmpf oge, %197, %257 : vector<8x256xf32>
    %cst_93 = arith.constant 1.000000e+00 : f32
    %cst_94 = arith.constant 0.000000e+00 : f32
    %259 = vector.broadcast %cst_93 : f32 to vector<8x256xf32>
    %260 = vector.broadcast %cst_94 : f32 to vector<8x256xf32>
    %261 = arith.select %258, %259, %260 : vector<8x256xi1>, vector<8x256xf32>
    %cst_95 = arith.constant 1.000000e+00 : f32
    %262 = vector.broadcast %cst_95 : f32 to vector<8x256xf32>
    %263 = arith.cmpf oge, %197, %262 : vector<8x256xf32>
    %cst_96 = arith.constant 1.000000e+00 : f32
    %cst_97 = arith.constant 0.000000e+00 : f32
    %264 = vector.broadcast %cst_96 : f32 to vector<8x256xf32>
    %265 = vector.broadcast %cst_97 : f32 to vector<8x256xf32>
    %266 = arith.select %263, %264, %265 : vector<8x256xi1>, vector<8x256xf32>
    %cst_98 = arith.constant 1.4000001 : f32
    %267 = vector.broadcast %cst_98 : f32 to vector<8x256xf32>
    %268 = arith.cmpf oge, %197, %267 : vector<8x256xf32>
    %cst_99 = arith.constant 1.000000e+00 : f32
    %cst_100 = arith.constant 0.000000e+00 : f32
    %269 = vector.broadcast %cst_99 : f32 to vector<8x256xf32>
    %270 = vector.broadcast %cst_100 : f32 to vector<8x256xf32>
    %271 = arith.select %268, %269, %270 : vector<8x256xi1>, vector<8x256xf32>
    %cst_101 = arith.constant 1.800000e+00 : f32
    %272 = vector.broadcast %cst_101 : f32 to vector<8x256xf32>
    %273 = arith.cmpf oge, %197, %272 : vector<8x256xf32>
    %cst_102 = arith.constant 1.000000e+00 : f32
    %cst_103 = arith.constant 0.000000e+00 : f32
    %274 = vector.broadcast %cst_102 : f32 to vector<8x256xf32>
    %275 = vector.broadcast %cst_103 : f32 to vector<8x256xf32>
    %276 = arith.select %273, %274, %275 : vector<8x256xi1>, vector<8x256xf32>
    %cst_104 = arith.constant 2.200000e+00 : f32
    %277 = vector.broadcast %cst_104 : f32 to vector<8x256xf32>
    %278 = arith.cmpf oge, %197, %277 : vector<8x256xf32>
    %cst_105 = arith.constant 1.000000e+00 : f32
    %cst_106 = arith.constant 0.000000e+00 : f32
    %279 = vector.broadcast %cst_105 : f32 to vector<8x256xf32>
    %280 = vector.broadcast %cst_106 : f32 to vector<8x256xf32>
    %281 = arith.select %278, %279, %280 : vector<8x256xi1>, vector<8x256xf32>
    %282 = arith.subf %226, %231 : vector<8x256xf32>
    %283 = arith.subf %231, %236 : vector<8x256xf32>
    %284 = arith.subf %236, %241 : vector<8x256xf32>
    %285 = arith.subf %241, %246 : vector<8x256xf32>
    %286 = arith.subf %246, %251 : vector<8x256xf32>
    %287 = arith.subf %251, %256 : vector<8x256xf32>
    %288 = arith.subf %256, %261 : vector<8x256xf32>
    %289 = arith.subf %261, %266 : vector<8x256xf32>
    %290 = arith.subf %266, %271 : vector<8x256xf32>
    %291 = arith.subf %271, %276 : vector<8x256xf32>
    %292 = arith.subf %276, %281 : vector<8x256xf32>
    %293 = arith.mulf %199, %282 : vector<8x256xf32>
    %294 = arith.mulf %203, %283 : vector<8x256xf32>
    %295 = arith.subf %293, %294 : vector<8x256xf32>
    %296 = arith.mulf %201, %283 : vector<8x256xf32>
    %297 = arith.mulf %205, %284 : vector<8x256xf32>
    %298 = arith.subf %296, %297 : vector<8x256xf32>
    %299 = arith.mulf %203, %284 : vector<8x256xf32>
    %300 = arith.mulf %207, %285 : vector<8x256xf32>
    %301 = arith.subf %299, %300 : vector<8x256xf32>
    %302 = arith.mulf %205, %285 : vector<8x256xf32>
    %303 = arith.mulf %209, %286 : vector<8x256xf32>
    %304 = arith.subf %302, %303 : vector<8x256xf32>
    %305 = arith.mulf %207, %286 : vector<8x256xf32>
    %306 = arith.mulf %211, %287 : vector<8x256xf32>
    %307 = arith.subf %305, %306 : vector<8x256xf32>
    %308 = arith.mulf %209, %287 : vector<8x256xf32>
    %309 = arith.mulf %213, %288 : vector<8x256xf32>
    %310 = arith.subf %308, %309 : vector<8x256xf32>
    %311 = arith.mulf %211, %288 : vector<8x256xf32>
    %312 = arith.mulf %215, %289 : vector<8x256xf32>
    %313 = arith.subf %311, %312 : vector<8x256xf32>
    %314 = arith.mulf %213, %289 : vector<8x256xf32>
    %315 = arith.mulf %217, %290 : vector<8x256xf32>
    %316 = arith.subf %314, %315 : vector<8x256xf32>
    %317 = arith.mulf %215, %290 : vector<8x256xf32>
    %318 = arith.mulf %219, %291 : vector<8x256xf32>
    %319 = arith.subf %317, %318 : vector<8x256xf32>
    %320 = arith.mulf %217, %291 : vector<8x256xf32>
    %321 = arith.mulf %221, %292 : vector<8x256xf32>
    %322 = arith.subf %320, %321 : vector<8x256xf32>
    %323 = arith.mulf %199, %295 : vector<8x256xf32>
    %324 = arith.mulf %205, %298 : vector<8x256xf32>
    %325 = arith.subf %323, %324 : vector<8x256xf32>
    %326 = arith.mulf %201, %298 : vector<8x256xf32>
    %327 = arith.mulf %207, %301 : vector<8x256xf32>
    %328 = arith.subf %326, %327 : vector<8x256xf32>
    %329 = arith.mulf %203, %301 : vector<8x256xf32>
    %330 = arith.mulf %209, %304 : vector<8x256xf32>
    %331 = arith.subf %329, %330 : vector<8x256xf32>
    %332 = arith.mulf %205, %304 : vector<8x256xf32>
    %333 = arith.mulf %211, %307 : vector<8x256xf32>
    %334 = arith.subf %332, %333 : vector<8x256xf32>
    %335 = arith.mulf %207, %307 : vector<8x256xf32>
    %336 = arith.mulf %213, %310 : vector<8x256xf32>
    %337 = arith.subf %335, %336 : vector<8x256xf32>
    %338 = arith.mulf %209, %310 : vector<8x256xf32>
    %339 = arith.mulf %215, %313 : vector<8x256xf32>
    %340 = arith.subf %338, %339 : vector<8x256xf32>
    %341 = arith.mulf %211, %313 : vector<8x256xf32>
    %342 = arith.mulf %217, %316 : vector<8x256xf32>
    %343 = arith.subf %341, %342 : vector<8x256xf32>
    %344 = arith.mulf %213, %316 : vector<8x256xf32>
    %345 = arith.mulf %219, %319 : vector<8x256xf32>
    %346 = arith.subf %344, %345 : vector<8x256xf32>
    %347 = arith.mulf %215, %319 : vector<8x256xf32>
    %348 = arith.mulf %221, %322 : vector<8x256xf32>
    %349 = arith.subf %347, %348 : vector<8x256xf32>
    %350 = arith.mulf %199, %325 : vector<8x256xf32>
    %351 = arith.mulf %207, %328 : vector<8x256xf32>
    %352 = arith.subf %350, %351 : vector<8x256xf32>
    %353 = arith.mulf %201, %328 : vector<8x256xf32>
    %354 = arith.mulf %209, %331 : vector<8x256xf32>
    %355 = arith.subf %353, %354 : vector<8x256xf32>
    %356 = arith.mulf %203, %331 : vector<8x256xf32>
    %357 = arith.mulf %211, %334 : vector<8x256xf32>
    %358 = arith.subf %356, %357 : vector<8x256xf32>
    %359 = arith.mulf %205, %334 : vector<8x256xf32>
    %360 = arith.mulf %213, %337 : vector<8x256xf32>
    %361 = arith.subf %359, %360 : vector<8x256xf32>
    %362 = arith.mulf %207, %337 : vector<8x256xf32>
    %363 = arith.mulf %215, %340 : vector<8x256xf32>
    %364 = arith.subf %362, %363 : vector<8x256xf32>
    %365 = arith.mulf %209, %340 : vector<8x256xf32>
    %366 = arith.mulf %217, %343 : vector<8x256xf32>
    %367 = arith.subf %365, %366 : vector<8x256xf32>
    %368 = arith.mulf %211, %343 : vector<8x256xf32>
    %369 = arith.mulf %219, %346 : vector<8x256xf32>
    %370 = arith.subf %368, %369 : vector<8x256xf32>
    %371 = arith.mulf %213, %346 : vector<8x256xf32>
    %372 = arith.mulf %221, %349 : vector<8x256xf32>
    %373 = arith.subf %371, %372 : vector<8x256xf32>
    %374 = arith.negf %197 : vector<8x256xf32>
    %375 = math.exp %374 : vector<8x256xf32>
    %cst_107 = arith.constant 1.000000e+00 : f32
    %376 = vector.broadcast %cst_107 : f32 to vector<8x256xf32>
    %377 = arith.addf %376, %375 : vector<8x256xf32>
    %378 = arith.divf %376, %377 : vector<8x256xf32>
    %379 = arith.mulf %197, %378 : vector<8x256xf32>
    %380 = tpu.concatenate %379, %352, %355, %358, %361, %364, %367, %370, %373 in 0 : vector<8x256xf32>, vector<8x256xf32>, vector<8x256xf32>, vector<8x256xf32>, vector<8x256xf32>, vector<8x256xf32>, vector<8x256xf32>, vector<8x256xf32>, vector<8x256xf32> -> vector<72x256xf32>
    %cst_108 = arith.constant dense<0.000000e+00> : vector<8x256xf32>
    %381 = tpu.matmul %1, %380, %cst_108 {dimension_numbers = #tpu.dot_dimension_numbers<[1], [0], [0], [1], [0, 0, 1, 1], [], []>} : vector<8x72xf32>, vector<72x256xf32>, vector<8x256xf32> -> vector<8x256xf32>
    %382 = vector.extract_strided_slice %381 {offsets = [0, 0], sizes = [1, 256], strides = [1, 1]} : vector<8x256xf32> to vector<1x256xf32>
    %383 = arith.negf %382 : vector<1x256xf32>
    %384 = math.exp %383 : vector<1x256xf32>
    %cst_109 = arith.constant 1.000000e+00 : f32
    %385 = vector.broadcast %cst_109 : f32 to vector<1x256xf32>
    %386 = arith.addf %385, %384 : vector<1x256xf32>
    %387 = arith.divf %385, %386 : vector<1x256xf32>
    %c0_110 = arith.constant 0 : index
    %c0_111 = arith.constant 0 : index
    %388 = vector.load %arg4[%c0_110, %c0_111] : memref<1x256xf32, #tpu.memory_space<vmem>>, vector<1x256xf32>
    tpu.vector_store %arg4[%c0_110, %c0_111], %387 {strides = array<i32>} : memref<1x256xf32, #tpu.memory_space<vmem>>, vector<1x256xf32>,
    return
  }
  func.func @transform_0(%arg0: i32) -> (i32, i32) {
    %c0_i32 = arith.constant 0 : i32
    %c0_i32_0 = arith.constant 0 : i32
    return %c0_i32, %arg0 : i32, i32
  }
  func.func @transform_1(%arg0: i32) -> (i32, i32) {
    %c0_i32 = arith.constant 0 : i32
    %c0_i32_0 = arith.constant 0 : i32
    %c0_i32_1 = arith.constant 0 : i32
    return %c0_i32, %c0_i32_0 : i32, i32
  }
  func.func @transform_2(%arg0: i32) -> (i32, i32) {
    %c0_i32 = arith.constant 0 : i32
    %c0_i32_0 = arith.constant 0 : i32
    %c0_i32_1 = arith.constant 0 : i32
    return %c0_i32, %c0_i32_0 : i32, i32
  }
  func.func @transform_3(%arg0: i32) -> (i32, i32) {
    %c0_i32 = arith.constant 0 : i32
    %c0_i32_0 = arith.constant 0 : i32
    return %c0_i32, %arg0 : i32, i32
  }
}

</mosaic_0001>

<llo_original>
// kernel: kan_thi_forward.1
$region0: #{kan_thi_forward.1}
  #allocation0 [shape = 'u32[]', space=smem, size = 0x4, offset = 0x4, fixed_abs, tag = 'smem constant byte address 0x4 - core index']
  #allocation1 [shape = 'u32[144,128]{1,0:T(1,128)}', space=vmem, size = 0x12000, scoped, tag = 'internal scratch']
  %s0 = inlined_call_operand.vmem [shape: f32[8,256], index: 0, kind: input, shape index: {}]
  %s1 = inlined_call_operand.vmem [shape: f32[8,72], index: 1, kind: input, shape index: {}]
  %s2 = inlined_call_operand.vmem [shape: f32[8,72], index: 2, kind: input, shape index: {}]
  %s3 = inlined_call_operand.vmem [shape: f32[1,256], index: 3, kind: output, shape index: {}]
  %s4 = sld [smem:[#allocation0]]
  $region22: #{kan_thi_forward.1} parent=0
    _
  %s6 = ssub.s32 1, %s4
  %s7 = scalar_select 0, %s6, %s4
  // Predicated region
  $region2: #{kan_thi_forward.1} parent=0 // pred_check
    _
  $region3: #{kan_thi_forward.1} parent=0 // pred_check_branch
    %9 = sbr.rel (0) target = $region5
  $region4: #{kan_thi_forward.1} parent=0 // pred_region
    _
  $region5: #{kan_thi_forward.1} parent=0 // pred_fallthru
    _
  // Predicated region
  $region6: #{kan_thi_forward.1} parent=0 // pred_check
    _
  $region7: #{kan_thi_forward.1} parent=0 // pred_check_branch
    %11 = sbr.rel (0) target = $region9
  $region8: #{kan_thi_forward.1} parent=0 // pred_region
    _
  $region9: #{kan_thi_forward.1} parent=0 // pred_fallthru
    _
  // Predicated region
  $region10: #{kan_thi_forward.1} parent=0 // pred_check
    _
  $region11: #{kan_thi_forward.1} parent=0 // pred_check_branch
    %13 = sbr.rel (0) target = $region13
  $region12: #{kan_thi_forward.1} parent=0 // pred_region
    _
  $region13: #{kan_thi_forward.1} parent=0 // pred_fallthru
    _
  %v14 = vld [vmem:[%s1] sm:$0xff]
  %v15 = vld [vmem:[%s2] sm:$0xff]
  %v16 = vld [vmem:[%s0] sm:$0xff]
  %v17 = vld [vmem:[%s0 + $0x8] sm:$0xff]
  %vm18 = vcmp.ne.f32.partialorder %v16, %v16
  %vm19 = vcmp.ne.f32.partialorder %v17, %v17
  %v20 = vsel %vm18, 0.0, %v16
  %v21 = vsel %vm19, 0.0, %v17
  %vm22 = vcmp.eq.f32.partialorder %v20, inf
  %vm23 = vcmp.eq.f32.partialorder %v21, inf
  %v24 = vsel %vm22, 3.4028235e+38, %v20
  %v25 = vsel %vm23, 3.4028235e+38, %v21
  %vm26 = vcmp.eq.f32.partialorder %v24, -inf
  %vm27 = vcmp.eq.f32.partialorder %v25, -inf
  %v28 = vsel %vm26, -3.4028235e+38, %v24
  %v29 = vsel %vm27, -3.4028235e+38, %v25
  %v30 = vsub.f32 %v28, -2.2
  %v31 = vsub.f32 %v29, -2.2
  %v32 = vsub.f32 %v28, -1.8
  %v33 = vsub.f32 %v29, -1.8
  %v34 = vsub.f32 %v28, -1.4
  %v35 = vsub.f32 %v29, -1.4
  %v36 = vsub.f32 %v28, -1.0
  %v37 = vsub.f32 %v29, -1.0
  %v38 = vsub.f32 %v28, -0.6
  %v39 = vsub.f32 %v29, -0.6
  %v40 = vsub.f32 %v28, -0.19999999
  %v41 = vsub.f32 %v29, -0.19999999
  %v42 = vsub.f32 %v28, 0.20000005
  %v43 = vsub.f32 %v29, 0.20000005
  %v44 = vsub.f32 %v28, 0.6
  %v45 = vsub.f32 %v29, 0.6
  %v46 = vsub.f32 %v28, 1.0
  %v47 = vsub.f32 %v29, 1.0
  %v48 = vsub.f32 %v28, 1.4000001
  %v49 = vsub.f32 %v29, 1.4000001
  %v50 = vsub.f32 %v28, 1.8
  %v51 = vsub.f32 %v29, 1.8
  %v52 = vsub.f32 %v28, 2.2
  %v53 = vsub.f32 %v29, 2.2
  %vm54 = vcmp.ge.f32.partialorder %v28, -2.2
  %vm55 = vcmp.ge.f32.partialorder %v29, -2.2
  %v56 = vsel %vm54, 1.0, 0.0
  %v57 = vsel %vm55, 1.0, 0.0
  %vm58 = vcmp.ge.f32.partialorder %v28, -1.8
  %vm59 = vcmp.ge.f32.partialorder %v29, -1.8
  %v60 = vsel %vm58, 1.0, 0.0
  %v61 = vsel %vm59, 1.0, 0.0
  %vm62 = vcmp.ge.f32.partialorder %v28, -1.4
  %vm63 = vcmp.ge.f32.partialorder %v29, -1.4
  %v64 = vsel %vm62, 1.0, 0.0
  %v65 = vsel %vm63, 1.0, 0.0
  %vm66 = vcmp.ge.f32.partialorder %v28, -1.0
  %vm67 = vcmp.ge.f32.partialorder %v29, -1.0
  %v68 = vsel %vm66, 1.0, 0.0
  %v69 = vsel %vm67, 1.0, 0.0
  %vm70 = vcmp.ge.f32.partialorder %v28, -0.6
  %vm71 = vcmp.ge.f32.partialorder %v29, -0.6
  %v72 = vsel %vm70, 1.0, 0.0
  %v73 = vsel %vm71, 1.0, 0.0
  %vm74 = vcmp.ge.f32.partialorder %v28, -0.19999999
  %vm75 = vcmp.ge.f32.partialorder %v29, -0.19999999
  %v76 = vsel %vm74, 1.0, 0.0
  %v77 = vsel %vm75, 1.0, 0.0
  %vm78 = vcmp.ge.f32.partialorder %v28, 0.20000005
  %vm79 = vcmp.ge.f32.partialorder %v29, 0.20000005
  %v80 = vsel %vm78, 1.0, 0.0
  %v81 = vsel %vm79, 1.0, 0.0
  %vm82 = vcmp.ge.f32.partialorder %v28, 0.6
  %vm83 = vcmp.ge.f32.partialorder %v29, 0.6
  %v84 = vsel %vm82, 1.0, 0.0
  %v85 = vsel %vm83, 1.0, 0.0
  %vm86 = vcmp.ge.f32.partialorder %v28, 1.0
  %vm87 = vcmp.ge.f32.partialorder %v29, 1.0
  %v88 = vsel %vm86, 1.0, 0.0
  %v89 = vsel %vm87, 1.0, 0.0
  %vm90 = vcmp.ge.f32.partialorder %v28, 1.4000001
  %vm91 = vcmp.ge.f32.partialorder %v29, 1.4000001
  %v92 = vsel %vm90, 1.0, 0.0
  %v93 = vsel %vm91, 1.0, 0.0
  %vm94 = vcmp.ge.f32.partialorder %v28, 1.8
  %vm95 = vcmp.ge.f32.partialorder %v29, 1.8
  %v96 = vsel %vm94, 1.0, 0.0
  %v97 = vsel %vm95, 1.0, 0.0
  %vm98 = vcmp.ge.f32.partialorder %v28, 2.2
  %vm99 = vcmp.ge.f32.partialorder %v29, 2.2
  %v100 = vsel %vm98, 1.0, 0.0
  %v101 = vsel %vm99, 1.0, 0.0
  %v102 = vsub.f32 %v56, %v60
  %v103 = vsub.f32 %v57, %v61
  %v104 = vsub.f32 %v60, %v64
  %v105 = vsub.f32 %v61, %v65
  %v106 = vsub.f32 %v64, %v68
  %v107 = vsub.f32 %v65, %v69
  %v108 = vsub.f32 %v68, %v72
  %v109 = vsub.f32 %v69, %v73
  %v110 = vsub.f32 %v72, %v76
  %v111 = vsub.f32 %v73, %v77
  %v112 = vsub.f32 %v76, %v80
  %v113 = vsub.f32 %v77, %v81
  %v114 = vsub.f32 %v80, %v84
  %v115 = vsub.f32 %v81, %v85
  %v116 = vsub.f32 %v84, %v88
  %v117 = vsub.f32 %v85, %v89
  %v118 = vsub.f32 %v88, %v92
  %v119 = vsub.f32 %v89, %v93
  %v120 = vsub.f32 %v92, %v96
  %v121 = vsub.f32 %v93, %v97
  %v122 = vsub.f32 %v96, %v100
  %v123 = vsub.f32 %v97, %v101
  %v124 = vmul.f32 %v30, %v102
  %v125 = vmul.f32 %v31, %v103
  %v126 = vmul.f32 %v34, %v104
  %v127 = vmul.f32 %v35, %v105
  %v128 = vsub.f32 %v124, %v126
  %v129 = vsub.f32 %v125, %v127
  %v130 = vmul.f32 %v32, %v104
  %v131 = vmul.f32 %v33, %v105
  %v132 = vmul.f32 %v36, %v106
  %v133 = vmul.f32 %v37, %v107
  %v134 = vsub.f32 %v130, %v132
  %v135 = vsub.f32 %v131, %v133
  %v136 = vmul.f32 %v34, %v106
  %v137 = vmul.f32 %v35, %v107
  %v138 = vmul.f32 %v38, %v108
  %v139 = vmul.f32 %v39, %v109
  %v140 = vsub.f32 %v136, %v138
  %v141 = vsub.f32 %v137, %v139
  %v142 = vmul.f32 %v36, %v108
  %v143 = vmul.f32 %v37, %v109
  %v144 = vmul.f32 %v40, %v110
  %v145 = vmul.f32 %v41, %v111
  %v146 = vsub.f32 %v142, %v144
  %v147 = vsub.f32 %v143, %v145
  %v148 = vmul.f32 %v38, %v110
  %v149 = vmul.f32 %v39, %v111
  %v150 = vmul.f32 %v42, %v112
  %v151 = vmul.f32 %v43, %v113
  %v152 = vsub.f32 %v148, %v150
  %v153 = vsub.f32 %v149, %v151
  %v154 = vmul.f32 %v40, %v112
  %v155 = vmul.f32 %v41, %v113
  %v156 = vmul.f32 %v44, %v114
  %v157 = vmul.f32 %v45, %v115
  %v158 = vsub.f32 %v154, %v156
  %v159 = vsub.f32 %v155, %v157
  %v160 = vmul.f32 %v42, %v114
  %v161 = vmul.f32 %v43, %v115
  %v162 = vmul.f32 %v46, %v116
  %v163 = vmul.f32 %v47, %v117
  %v164 = vsub.f32 %v160, %v162
  %v165 = vsub.f32 %v161, %v163
  %v166 = vmul.f32 %v44, %v116
  %v167 = vmul.f32 %v45, %v117
  %v168 = vmul.f32 %v48, %v118
  %v169 = vmul.f32 %v49, %v119
  %v170 = vsub.f32 %v166, %v168
  %v171 = vsub.f32 %v167, %v169
  %v172 = vmul.f32 %v46, %v118
  %v173 = vmul.f32 %v47, %v119
  %v174 = vmul.f32 %v50, %v120
  %v175 = vmul.f32 %v51, %v121
  %v176 = vsub.f32 %v172, %v174
  %v177 = vsub.f32 %v173, %v175
  %v178 = vmul.f32 %v48, %v120
  %v179 = vmul.f32 %v49, %v121
  %v180 = vmul.f32 %v52, %v122
  %v181 = vmul.f32 %v53, %v123
  %v182 = vsub.f32 %v178, %v180
  %v183 = vsub.f32 %v179, %v181
  %v184 = vmul.f32 %v30, %v128
  %v185 = vmul.f32 %v31, %v129
  %v186 = vmul.f32 %v36, %v134
  %v187 = vmul.f32 %v37, %v135
  %v188 = vsub.f32 %v184, %v186
  %v189 = vsub.f32 %v185, %v187
  %v190 = vmul.f32 %v32, %v134
  %v191 = vmul.f32 %v33, %v135
  %v192 = vmul.f32 %v38, %v140
  %v193 = vmul.f32 %v39, %v141
  %v194 = vsub.f32 %v190, %v192
  %v195 = vsub.f32 %v191, %v193
  %v196 = vmul.f32 %v34, %v140
  %v197 = vmul.f32 %v35, %v141
  %v198 = vmul.f32 %v40, %v146
  %v199 = vmul.f32 %v41, %v147
  %v200 = vsub.f32 %v196, %v198
  %v201 = vsub.f32 %v197, %v199
  %v202 = vmul.f32 %v36, %v146
  %v203 = vmul.f32 %v37, %v147
  %v204 = vmul.f32 %v42, %v152
  %v205 = vmul.f32 %v43, %v153
  %v206 = vsub.f32 %v202, %v204
  %v207 = vsub.f32 %v203, %v205
  %v208 = vmul.f32 %v38, %v152
  %v209 = vmul.f32 %v39, %v153
  %v210 = vmul.f32 %v44, %v158
  %v211 = vmul.f32 %v45, %v159
  %v212 = vsub.f32 %v208, %v210
  %v213 = vsub.f32 %v209, %v211
  %v214 = vmul.f32 %v40, %v158
  %v215 = vmul.f32 %v41, %v159
  %v216 = vmul.f32 %v46, %v164
  %v217 = vmul.f32 %v47, %v165
  %v218 = vsub.f32 %v214, %v216
  %v219 = vsub.f32 %v215, %v217
  %v220 = vmul.f32 %v42, %v164
  %v221 = vmul.f32 %v43, %v165
  %v222 = vmul.f32 %v48, %v170
  %v223 = vmul.f32 %v49, %v171
  %v224 = vsub.f32 %v220, %v222
  %v225 = vsub.f32 %v221, %v223
  %v226 = vmul.f32 %v44, %v170
  %v227 = vmul.f32 %v45, %v171
  %v228 = vmul.f32 %v50, %v176
  %v229 = vmul.f32 %v51, %v177
  %v230 = vsub.f32 %v226, %v228
  %v231 = vsub.f32 %v227, %v229
  %v232 = vmul.f32 %v46, %v176
  %v233 = vmul.f32 %v47, %v177
  %v234 = vmul.f32 %v52, %v182
  %v235 = vmul.f32 %v53, %v183
  %v236 = vsub.f32 %v232, %v234
  %v237 = vsub.f32 %v233, %v235
  %v238 = vmul.f32 %v30, %v188
  %v239 = vmul.f32 %v31, %v189
  %v240 = vmul.f32 %v38, %v194
  %v241 = vmul.f32 %v39, %v195
  %v242 = vsub.f32 %v238, %v240
  %v243 = vsub.f32 %v239, %v241
  %v244 = vmul.f32 %v32, %v194
  %v245 = vmul.f32 %v33, %v195
  %v246 = vmul.f32 %v40, %v200
  %v247 = vmul.f32 %v41, %v201
  %v248 = vsub.f32 %v244, %v246
  %v249 = vsub.f32 %v245, %v247
  %v250 = vmul.f32 %v34, %v200
  %v251 = vmul.f32 %v35, %v201
  %v252 = vmul.f32 %v42, %v206
  %v253 = vmul.f32 %v43, %v207
  %v254 = vsub.f32 %v250, %v252
  %v255 = vsub.f32 %v251, %v253
  %v256 = vmul.f32 %v36, %v206
  %v257 = vmul.f32 %v37, %v207
  %v258 = vmul.f32 %v44, %v212
  %v259 = vmul.f32 %v45, %v213
  %v260 = vsub.f32 %v256, %v258
  %v261 = vsub.f32 %v257, %v259
  %v262 = vmul.f32 %v38, %v212
  %v263 = vmul.f32 %v39, %v213
  %v264 = vmul.f32 %v46, %v218
  %v265 = vmul.f32 %v47, %v219
  %v266 = vsub.f32 %v262, %v264
  %v267 = vsub.f32 %v263, %v265
  %v268 = vmul.f32 %v40, %v218
  %v269 = vmul.f32 %v41, %v219
  %v270 = vmul.f32 %v48, %v224
  %v271 = vmul.f32 %v49, %v225
  %v272 = vsub.f32 %v268, %v270
  %v273 = vsub.f32 %v269, %v271
  %v274 = vmul.f32 %v42, %v224
  %v275 = vmul.f32 %v43, %v225
  %v276 = vmul.f32 %v50, %v230
  %v277 = vmul.f32 %v51, %v231
  %v278 = vsub.f32 %v274, %v276
  %v279 = vsub.f32 %v275, %v277
  %v280 = vmul.f32 %v44, %v230
  %v281 = vmul.f32 %v45, %v231
  %v282 = vmul.f32 %v52, %v236
  %v283 = vmul.f32 %v53, %v237
  %v284 = vsub.f32 %v280, %v282
  %v285 = vsub.f32 %v281, %v283
  %v286 = vxor.u32 %v28, 2147483648
  %v287 = vxor.u32 %v29, 2147483648
  %v288 = vmul.f32 %v286, 1.442695
  %v289 = vpow.pop %v288
  %v290 = vmul.f32 %v287, 1.442695
  %v291 = vpow.pop %v290
  %v292 = vadd.f32 %v289, 1.0
  %v293 = vadd.f32 %v291, 1.0
  %v294 = vrcp.pop %v292
  %v295 = vmul.f32 1.0, %v294
  %v296 = vrcp.pop %v293
  %v297 = vmul.f32 1.0, %v296
  %v298 = vmul.f32 %v28, %v295
  %v299 = vmul.f32 %v29, %v297
  %vm300 = vcmask 588800
  %v302 = vsel %vm300, %v14, 0
  %304 = vmatprep.subr.mxu0 %v299
  %305 = vmatpush1.msra.mxu0 %v298
  %306 = vmatprep.subr.mxu0 %v243
  %307 = vmatpush1.msra.mxu0 %v242
  %308 = vmatprep.subr.mxu0 %v249
  %309 = vmatpush1.msra.mxu0 %v248
  %310 = vmatprep.subr.mxu0 %v255
  %311 = vmatpush1.msra.mxu0 %v254
  %312 = vmatprep.subr.mxu0 %v261
  %313 = vmatpush1.msra.mxu0 %v260
  %314 = vmatprep.subr.mxu0 %v267
  %315 = vmatpush1.msra.mxu0 %v266
  %316 = vmatprep.subr.mxu0 %v273
  %317 = vmatpush1.msra.mxu0 %v272
  %318 = vmatprep.subr.mxu0 %v279
  %319 = vmatpush1.msra.mxu0 %v278
  %320 = vmatprep.subr.mxu0 %v285
  %321 = vmatpush1.msra.mxu0 %v284
  %322 = vmatprep.subr.mxu0 0.0
  %323 = vmatpush1.msra.mxu0 0.0
  %324 = vmatprep.subr.mxu0 0.0
  %325 = vmatpush1.msra.mxu0 0.0
  %326 = vmatprep.subr.mxu0 0.0
  %327 = vmatpush1.msra.mxu0 0.0
  %328 = vmatprep.subr.mxu0 0.0
  %329 = vmatpush1.msra.mxu0 0.0
  %330 = vmatprep.subr.mxu0 0.0
  %331 = vmatpush1.msra.mxu0 0.0
  %332 = vmatprep.subr.mxu0 0.0
  %333 = vmatpush1.msra.mxu0 0.0
  %334 = vmatprep.subr.mxu0 0.0
  %335 = vmatpush1.msra.mxu0 0.0
  %336 = vmatprep.subr.mxu0 0.0
  %337 = vmatpush1.msra.mxu0 0.0
  %338 = vmatprep.subr.mxu0 0.0
  %339 = vmatpush1.msra.mxu0 0.0
  %340 = vmatprep.subr.mxu0 0.0
  %341 = vmatpush1.msra.mxu0 0.0
  %342 = vmatprep.subr.mxu0 0.0
  %343 = vmatpush1.msra.mxu0 0.0
  %344 = vmatprep.subr.mxu0 0.0
  %345 = vmatpush1.msra.mxu0 0.0
  %346 = vmatprep.subr.mxu0 0.0
  %347 = vmatpush1.msra.mxu0 0.0
  %348 = vmatprep.subr.mxu0 0.0
  %349 = vmatpush1.msra.mxu0 0.0
  %350 = vmatprep.subr.mxu0 0.0
  %351 = vmatpush1.msra.mxu0 0.0
  %352 = vmatprep.subr.mxu0 0.0
  %353 = vmatpush1.msra.mxu0 0.0
  %354 = vmatprep.subr.mxu0 0.0
  %355 = vmatpush1.msra.mxu0 0.0
  %356 = vmatprep.subr.mxu0 0.0
  %357 = vmatpush1.msra.mxu0 0.0
  %358 = vmatprep.subr.mxu0 0.0
  %359 = vmatpush1.msra.mxu0 0.0
  %360 = vmatprep.subr.mxu0 0.0
  %361 = vmatpush1.msra.mxu0 0.0
  %362 = vmatprep.subr.mxu0 0.0
  %363 = vmatpush1.msra.mxu0 0.0
  %364 = vmatprep.subr.mxu0 0.0
  %365 = vmatpush1.msra.mxu0 0.0
  %366 = vmatprep.subr.mxu0 0.0
  %367 = vmatpush1.msra.mxu0 0.0
  %368 = vmatprep.mubr.f32.mxu0 0.0
  %369 = vmatmul.mubr.f32.gmra.mrb[0].mxu0 %v302
  %v370 = vpop.f32.mrb[0].mxu0
  %v371 = vadd.f32 0.0, %v370
  %v372 = vpop.f32.mrb[0].mxu0
  %v373 = vadd.f32 0.0, %v372
  %374 = vdwg.mxu0
  %v375 = vsub.f32 %v371, -2.2
  %v376 = vsub.f32 %v373, -2.2
  %v377 = vsub.f32 %v371, -1.8
  %v378 = vsub.f32 %v373, -1.8
  %v379 = vsub.f32 %v371, -1.4
  %v380 = vsub.f32 %v373, -1.4
  %v381 = vsub.f32 %v371, -1.0
  %v382 = vsub.f32 %v373, -1.0
  %v383 = vsub.f32 %v371, -0.6
  %v384 = vsub.f32 %v373, -0.6
  %v385 = vsub.f32 %v371, -0.19999999
  %v386 = vsub.f32 %v373, -0.19999999
  %v387 = vsub.f32 %v371, 0.20000005
  %v388 = vsub.f32 %v373, 0.20000005
  %v389 = vsub.f32 %v371, 0.6
  %v390 = vsub.f32 %v373, 0.6
  %v391 = vsub.f32 %v371, 1.0
  %v392 = vsub.f32 %v373, 1.0
  %v393 = vsub.f32 %v371, 1.4000001
  %v394 = vsub.f32 %v373, 1.4000001
  %v395 = vsub.f32 %v371, 1.8
  %v396 = vsub.f32 %v373, 1.8
  %v397 = vsub.f32 %v371, 2.2
  %v398 = vsub.f32 %v373, 2.2
  %vm399 = vcmp.ge.f32.partialorder %v371, -2.2
  %vm400 = vcmp.ge.f32.partialorder %v373, -2.2
  %v401 = vsel %vm399, 1.0, 0.0
  %v402 = vsel %vm400, 1.0, 0.0
  %vm403 = vcmp.ge.f32.partialorder %v371, -1.8
  %vm404 = vcmp.ge.f32.partialorder %v373, -1.8
  %v405 = vsel %vm403, 1.0, 0.0
  %v406 = vsel %vm404, 1.0, 0.0
  %vm407 = vcmp.ge.f32.partialorder %v371, -1.4
  %vm408 = vcmp.ge.f32.partialorder %v373, -1.4
  %v409 = vsel %vm407, 1.0, 0.0
  %v410 = vsel %vm408, 1.0, 0.0
  %vm411 = vcmp.ge.f32.partialorder %v371, -1.0
  %vm412 = vcmp.ge.f32.partialorder %v373, -1.0
  %v413 = vsel %vm411, 1.0, 0.0
  %v414 = vsel %vm412, 1.0, 0.0
  %vm415 = vcmp.ge.f32.partialorder %v371, -0.6
  %vm416 = vcmp.ge.f32.partialorder %v373, -0.6
  %v417 = vsel %vm415, 1.0, 0.0
  %v418 = vsel %vm416, 1.0, 0.0
  %vm419 = vcmp.ge.f32.partialorder %v371, -0.19999999
  %vm420 = vcmp.ge.f32.partialorder %v373, -0.19999999
  %v421 = vsel %vm419, 1.0, 0.0
  %v422 = vsel %vm420, 1.0, 0.0
  %vm423 = vcmp.ge.f32.partialorder %v371, 0.20000005
  %vm424 = vcmp.ge.f32.partialorder %v373, 0.20000005
  %v425 = vsel %vm423, 1.0, 0.0
  %v426 = vsel %vm424, 1.0, 0.0
  %vm427 = vcmp.ge.f32.partialorder %v371, 0.6
  %vm428 = vcmp.ge.f32.partialorder %v373, 0.6
  %v429 = vsel %vm427, 1.0, 0.0
  %v430 = vsel %vm428, 1.0, 0.0
  %vm431 = vcmp.ge.f32.partialorder %v371, 1.0
  %vm432 = vcmp.ge.f32.partialorder %v373, 1.0
  %v433 = vsel %vm431, 1.0, 0.0
  %v434 = vsel %vm432, 1.0, 0.0
  %vm435 = vcmp.ge.f32.partialorder %v371, 1.4000001
  %vm436 = vcmp.ge.f32.partialorder %v373, 1.4000001
  %v437 = vsel %vm435, 1.0, 0.0
  %v438 = vsel %vm436, 1.0, 0.0
  %vm439 = vcmp.ge.f32.partialorder %v371, 1.8
  %vm440 = vcmp.ge.f32.partialorder %v373, 1.8
  %v441 = vsel %vm439, 1.0, 0.0
  %v442 = vsel %vm440, 1.0, 0.0
  %vm443 = vcmp.ge.f32.partialorder %v371, 2.2
  %vm444 = vcmp.ge.f32.partialorder %v373, 2.2
  %v445 = vsel %vm443, 1.0, 0.0
  %v446 = vsel %vm444, 1.0, 0.0
  %v447 = vsub.f32 %v401, %v405
  %v448 = vsub.f32 %v402, %v406
  %v449 = vsub.f32 %v405, %v409
  %v450 = vsub.f32 %v406, %v410
  %v451 = vsub.f32 %v409, %v413
  %v452 = vsub.f32 %v410, %v414
  %v453 = vsub.f32 %v413, %v417
  %v454 = vsub.f32 %v414, %v418
  %v455 = vsub.f32 %v417, %v421
  %v456 = vsub.f32 %v418, %v422
  %v457 = vsub.f32 %v421, %v425
  %v458 = vsub.f32 %v422, %v426
  %v459 = vsub.f32 %v425, %v429
  %v460 = vsub.f32 %v426, %v430
  %v461 = vsub.f32 %v429, %v433
  %v462 = vsub.f32 %v430, %v434
  %v463 = vsub.f32 %v433, %v437
  %v464 = vsub.f32 %v434, %v438
  %v465 = vsub.f32 %v437, %v441
  %v466 = vsub.f32 %v438, %v442
  %v467 = vsub.f32 %v441, %v445
  %v468 = vsub.f32 %v442, %v446
  %v469 = vmul.f32 %v375, %v447
  %v470 = vmul.f32 %v376, %v448
  %v471 = vmul.f32 %v379, %v449
  %v472 = vmul.f32 %v380, %v450
  %v473 = vsub.f32 %v469, %v471
  %v474 = vsub.f32 %v470, %v472
  %v475 = vmul.f32 %v377, %v449
  %v476 = vmul.f32 %v378, %v450
  %v477 = vmul.f32 %v381, %v451
  %v478 = vmul.f32 %v382, %v452
  %v479 = vsub.f32 %v475, %v477
  %v480 = vsub.f32 %v476, %v478
  %v481 = vmul.f32 %v379, %v451
  %v482 = vmul.f32 %v380, %v452
  %v483 = vmul.f32 %v383, %v453
  %v484 = vmul.f32 %v384, %v454
  %v485 = vsub.f32 %v481, %v483
  %v486 = vsub.f32 %v482, %v484
  %v487 = vmul.f32 %v381, %v453
  %v488 = vmul.f32 %v382, %v454
  %v489 = vmul.f32 %v385, %v455
  %v490 = vmul.f32 %v386, %v456
  %v491 = vsub.f32 %v487, %v489
  %v492 = vsub.f32 %v488, %v490
  %v493 = vmul.f32 %v383, %v455
  %v494 = vmul.f32 %v384, %v456
  %v495 = vmul.f32 %v387, %v457
  %v496 = vmul.f32 %v388, %v458
  %v497 = vsub.f32 %v493, %v495
  %v498 = vsub.f32 %v494, %v496
  %v499 = vmul.f32 %v385, %v457
  %v500 = vmul.f32 %v386, %v458
  %v501 = vmul.f32 %v389, %v459
  %v502 = vmul.f32 %v390, %v460
  %v503 = vsub.f32 %v499, %v501
  %v504 = vsub.f32 %v500, %v502
  %v505 = vmul.f32 %v387, %v459
  %v506 = vmul.f32 %v388, %v460
  %v507 = vmul.f32 %v391, %v461
  %v508 = vmul.f32 %v392, %v462
  %v509 = vsub.f32 %v505, %v507
  %v510 = vsub.f32 %v506, %v508
  %v511 = vmul.f32 %v389, %v461
  %v512 = vmul.f32 %v390, %v462
  %v513 = vmul.f32 %v393, %v463
  %v514 = vmul.f32 %v394, %v464
  %v515 = vsub.f32 %v511, %v513
  %v516 = vsub.f32 %v512, %v514
  %v517 = vmul.f32 %v391, %v463
  %v518 = vmul.f32 %v392, %v464
  %v519 = vmul.f32 %v395, %v465
  %v520 = vmul.f32 %v396, %v466
  %v521 = vsub.f32 %v517, %v519
  %v522 = vsub.f32 %v518, %v520
  %v523 = vmul.f32 %v393, %v465
  %v524 = vmul.f32 %v394, %v466
  %v525 = vmul.f32 %v397, %v467
  %v526 = vmul.f32 %v398, %v468
  %v527 = vsub.f32 %v523, %v525
  %v528 = vsub.f32 %v524, %v526
  %v529 = vmul.f32 %v375, %v473
  %v530 = vmul.f32 %v376, %v474
  %v531 = vmul.f32 %v381, %v479
  %v532 = vmul.f32 %v382, %v480
  %v533 = vsub.f32 %v529, %v531
  %v534 = vsub.f32 %v530, %v532
  %v535 = vmul.f32 %v377, %v479
  %v536 = vmul.f32 %v378, %v480
  %v537 = vmul.f32 %v383, %v485
  %v538 = vmul.f32 %v384, %v486
  %v539 = vsub.f32 %v535, %v537
  %v540 = vsub.f32 %v536, %v538
  %v541 = vmul.f32 %v379, %v485
  %v542 = vmul.f32 %v380, %v486
  %v543 = vmul.f32 %v385, %v491
  %v544 = vmul.f32 %v386, %v492
  %v545 = vsub.f32 %v541, %v543
  %v546 = vsub.f32 %v542, %v544
  %v547 = vmul.f32 %v381, %v491
  %v548 = vmul.f32 %v382, %v492
  %v549 = vmul.f32 %v387, %v497
  %v550 = vmul.f32 %v388, %v498
  %v551 = vsub.f32 %v547, %v549
  %v552 = vsub.f32 %v548, %v550
  %v553 = vmul.f32 %v383, %v497
  %v554 = vmul.f32 %v384, %v498
  %v555 = vmul.f32 %v389, %v503
  %v556 = vmul.f32 %v390, %v504
  %v557 = vsub.f32 %v553, %v555
  %v558 = vsub.f32 %v554, %v556
  %v559 = vmul.f32 %v385, %v503
  %v560 = vmul.f32 %v386, %v504
  %v561 = vmul.f32 %v391, %v509
  %v562 = vmul.f32 %v392, %v510
  %v563 = vsub.f32 %v559, %v561
  %v564 = vsub.f32 %v560, %v562
  %v565 = vmul.f32 %v387, %v509
  %v566 = vmul.f32 %v388, %v510
  %v567 = vmul.f32 %v393, %v515
  %v568 = vmul.f32 %v394, %v516
  %v569 = vsub.f32 %v565, %v567
  %v570 = vsub.f32 %v566, %v568
  %v571 = vmul.f32 %v389, %v515
  %v572 = vmul.f32 %v390, %v516
  %v573 = vmul.f32 %v395, %v521
  %v574 = vmul.f32 %v396, %v522
  %v575 = vsub.f32 %v571, %v573
  %v576 = vsub.f32 %v572, %v574
  %v577 = vmul.f32 %v391, %v521
  %v578 = vmul.f32 %v392, %v522
  %v579 = vmul.f32 %v397, %v527
  %v580 = vmul.f32 %v398, %v528
  %v581 = vsub.f32 %v577, %v579
  %v582 = vsub.f32 %v578, %v580
  %v583 = vmul.f32 %v375, %v533
  %v584 = vmul.f32 %v376, %v534
  %v585 = vmul.f32 %v383, %v539
  %v586 = vmul.f32 %v384, %v540
  %v587 = vsub.f32 %v583, %v585
  %v588 = vsub.f32 %v584, %v586
  %v589 = vmul.f32 %v377, %v539
  %v590 = vmul.f32 %v378, %v540
  %v591 = vmul.f32 %v385, %v545
  %v592 = vmul.f32 %v386, %v546
  %v593 = vsub.f32 %v589, %v591
  %v594 = vsub.f32 %v590, %v592
  %v595 = vmul.f32 %v379, %v545
  %v596 = vmul.f32 %v380, %v546
  %v597 = vmul.f32 %v387, %v551
  %v598 = vmul.f32 %v388, %v552
  %v599 = vsub.f32 %v595, %v597
  %v600 = vsub.f32 %v596, %v598
  %v601 = vmul.f32 %v381, %v551
  %v602 = vmul.f32 %v382, %v552
  %v603 = vmul.f32 %v389, %v557
  %v604 = vmul.f32 %v390, %v558
  %v605 = vsub.f32 %v601, %v603
  %v606 = vsub.f32 %v602, %v604
  %v607 = vmul.f32 %v383, %v557
  %v608 = vmul.f32 %v384, %v558
  %v609 = vmul.f32 %v391, %v563
  %v610 = vmul.f32 %v392, %v564
  %v611 = vsub.f32 %v607, %v609
  %v612 = vsub.f32 %v608, %v610
  %v613 = vmul.f32 %v385, %v563
  %v614 = vmul.f32 %v386, %v564
  %v615 = vmul.f32 %v393, %v569
  %v616 = vmul.f32 %v394, %v570
  %v617 = vsub.f32 %v613, %v615
  %v618 = vsub.f32 %v614, %v616
  %v619 = vmul.f32 %v387, %v569
  %v620 = vmul.f32 %v388, %v570
  %v621 = vmul.f32 %v395, %v575
  %v622 = vmul.f32 %v396, %v576
  %v623 = vsub.f32 %v619, %v621
  %v624 = vsub.f32 %v620, %v622
  %v625 = vmul.f32 %v389, %v575
  %v626 = vmul.f32 %v390, %v576
  %v627 = vmul.f32 %v397, %v581
  %v628 = vmul.f32 %v398, %v582
  %v629 = vsub.f32 %v625, %v627
  %v630 = vsub.f32 %v626, %v628
  %v631 = vxor.u32 %v371, 2147483648
  %v632 = vxor.u32 %v373, 2147483648
  %v633 = vmul.f32 %v631, 1.442695
  %v634 = vpow.pop %v633
  %v635 = vmul.f32 %v632, 1.442695
  %v636 = vpow.pop %v635
  %v637 = vadd.f32 %v634, 1.0
  %v638 = vadd.f32 %v636, 1.0
  %v639 = vrcp.pop %v637
  %v640 = vmul.f32 1.0, %v639
  %v641 = vrcp.pop %v638
  %v642 = vmul.f32 1.0, %v641
  %v643 = vmul.f32 %v371, %v640
  %v644 = vmul.f32 %v373, %v642
  %v646 = vsel %vm300, %v15, 0
  %648 = vmatprep.subr.mxu0 %v644
  %649 = vmatpush1.msra.mxu0 %v643
  %650 = vmatprep.subr.mxu0 %v588
  %651 = vmatpush1.msra.mxu0 %v587
  %652 = vmatprep.subr.mxu0 %v594
  %653 = vmatpush1.msra.mxu0 %v593
  %654 = vmatprep.subr.mxu0 %v600
  %655 = vmatpush1.msra.mxu0 %v599
  %656 = vmatprep.subr.mxu0 %v606
  %657 = vmatpush1.msra.mxu0 %v605
  %658 = vmatprep.subr.mxu0 %v612
  %659 = vmatpush1.msra.mxu0 %v611
  %660 = vmatprep.subr.mxu0 %v618
  %661 = vmatpush1.msra.mxu0 %v617
  %662 = vmatprep.subr.mxu0 %v624
  %663 = vmatpush1.msra.mxu0 %v623
  %664 = vmatprep.subr.mxu0 %v630
  %665 = vmatpush1.msra.mxu0 %v629
  %666 = vmatprep.subr.mxu0 0.0
  %667 = vmatpush1.msra.mxu0 0.0
  %668 = vmatprep.subr.mxu0 0.0
  %669 = vmatpush1.msra.mxu0 0.0
  %670 = vmatprep.subr.mxu0 0.0
  %671 = vmatpush1.msra.mxu0 0.0
  %672 = vmatprep.subr.mxu0 0.0
  %673 = vmatpush1.msra.mxu0 0.0
  %674 = vmatprep.subr.mxu0 0.0
  %675 = vmatpush1.msra.mxu0 0.0
  %676 = vmatprep.subr.mxu0 0.0
  %677 = vmatpush1.msra.mxu0 0.0
  %678 = vmatprep.subr.mxu0 0.0
  %679 = vmatpush1.msra.mxu0 0.0
  %680 = vmatprep.subr.mxu0 0.0
  %681 = vmatpush1.msra.mxu0 0.0
  %682 = vmatprep.subr.mxu0 0.0
  %683 = vmatpush1.msra.mxu0 0.0
  %684 = vmatprep.subr.mxu0 0.0
  %685 = vmatpush1.msra.mxu0 0.0
  %686 = vmatprep.subr.mxu0 0.0
  %687 = vmatpush1.msra.mxu0 0.0
  %688 = vmatprep.subr.mxu0 0.0
  %689 = vmatpush1.msra.mxu0 0.0
  %690 = vmatprep.subr.mxu0 0.0
  %691 = vmatpush1.msra.mxu0 0.0
  %692 = vmatprep.subr.mxu0 0.0
  %693 = vmatpush1.msra.mxu0 0.0
  %694 = vmatprep.subr.mxu0 0.0
  %695 = vmatpush1.msra.mxu0 0.0
  %696 = vmatprep.subr.mxu0 0.0
  %697 = vmatpush1.msra.mxu0 0.0
  %698 = vmatprep.subr.mxu0 0.0
  %699 = vmatpush1.msra.mxu0 0.0
  %700 = vmatprep.subr.mxu0 0.0
  %701 = vmatpush1.msra.mxu0 0.0
  %702 = vmatprep.subr.mxu0 0.0
  %703 = vmatpush1.msra.mxu0 0.0
  %704 = vmatprep.subr.mxu0 0.0
  %705 = vmatpush1.msra.mxu0 0.0
  %706 = vmatprep.subr.mxu0 0.0
  %707 = vmatpush1.msra.mxu0 0.0
  %708 = vmatprep.subr.mxu0 0.0
  %709 = vmatpush1.msra.mxu0 0.0
  %710 = vmatprep.subr.mxu0 0.0
  %711 = vmatpush1.msra.mxu0 0.0
  %712 = vmatprep.mubr.f32.mxu0 0.0
  %713 = vmatmul.mubr.f32.gmra.mrb[0].mxu0 %v646
  %v714 = vpop.f32.mrb[0].mxu0
  %v715 = vadd.f32 0.0, %v714
  %v716 = vpop.f32.mrb[0].mxu0
  %v717 = vadd.f32 0.0, %v716
  %718 = vdwg.mxu0
  %v719 = vxor.u32 %v715, 2147483648
  %v720 = vxor.u32 %v717, 2147483648
  %v721 = vmul.f32 %v719, 1.442695
  %v722 = vpow.pop %v721
  %v723 = vmul.f32 %v720, 1.442695
  %v724 = vpow.pop %v723
  %v725 = vadd.f32 %v722, 1.0
  %v726 = vadd.f32 %v724, 1.0
  %v727 = vrcp.pop %v725
  %v728 = vmul.f32 1.0, %v727
  %v729 = vrcp.pop %v726
  %v730 = vmul.f32 1.0, %v729
  %v733 = vcombine.low %v728, %v730
  %v735 = vunpack.c.l.s4 1966171168
  %v736 = vunpack.c.0.s8 %v735
  %v737 = vlaneseq
  %v738 = vshrl.u32 %v737, 7
  %v739 = vsub.s32 %v736, %v738
  %v740 = vrot.slane %v733, %v739
  %v742 = vunpack.c.l.s4 1966171168
  %v743 = vunpack.c.0.s8 %v742
  %v744 = vlaneseq
  %v745 = vshrl.u32 %v744, 7
  %v746 = vsub.s32 %v743, %v745
  %v747 = vrot.slane %v740, %v746
  %v749 = vlaneseq
  %vm750 = vcmp.ge.s32.totalorder %v749, 0
  %vm751 = vcmp.lt.s32.totalorder %v749, 256
  %vm752 = vmand %vm750, %vm751
  %753 = vst.msk [vmem:[%s3] sm:$0x3] %vm752, %v747
  // Predicated region
  $region14: #{kan_thi_forward.1} parent=0 // pred_check
    _
  $region15: #{kan_thi_forward.1} parent=0 // pred_check_branch
    %755 = sbr.rel (0) target = $region17
  $region16: #{kan_thi_forward.1} parent=0 // pred_region
    _
  $region17: #{kan_thi_forward.1} parent=0 // pred_fallthru
    _
  // Predicated region
  $region18: #{kan_thi_forward.1} parent=0 // pred_check
    _
  $region19: #{kan_thi_forward.1} parent=0 // pred_check_branch
    %757 = sbr.rel (0) target = $region21
  $region20: #{kan_thi_forward.1} parent=0 // pred_region
    _
  $region21: #{kan_thi_forward.1} parent=0 // pred_fallthru
    _

</llo_original>
